<compile_context>
chip_gen: v5e
topology: v5e:2x2
jax: 0.10.0
libtpu: 0.0.40
codegen_flags: <defaults>
</compile_context>

<pallas_src>
import functools

import jax
import jax.numpy as jnp
from jax import lax
from jax.experimental import pallas as pl
from jax.experimental.pallas import tpu as pltpu


def identity_block_kernel(x_ref, w1_ref, s1_ref, b1_ref,
                          w2_ref, s2_ref, b2_ref,
                          w3_ref, s3_ref, b3_ref, mask_ref,
                          o_ref, *, H, W, final_relu):
    P = H * W

    # ---- conv1 (1x1, bias=False) + BN1 + ReLU ---------------------------------
    # (F1, C) @ (C, P) -> (F1, P); bf16 operands, f32 accumulate, f32 epilogue.
    x_bf = x_ref[0].astype(jnp.bfloat16)                         # (C, P)
    h1 = jnp.dot(w1_ref[...], x_bf, preferred_element_type=jnp.float32)
    h1 = jnp.maximum(h1 * s1_ref[...] + b1_ref[...], 0.0)
    h1 = h1.astype(jnp.bfloat16)                                 # (F1, P)

    # ---- conv2 (3x3, stride=1, padding=1, bias=False) + BN2 + ReLU ------------
    # Single im2col matmul: 9 circularly-shifted copies of h1 (out-of-image lanes
    # zeroed by precomputed masks), concatenated to (9*F1, P), one K=9*F1 matmul.
    def shifted(a, d):
        # out[:, p] = a[:, (p + d) % P]; wrapped / out-of-image lanes get masked.
        dd = d % P
        if dd == 0:
            return a
        return jnp.concatenate([a[:, dd:], a[:, :dd]], axis=1)

    taps = []
    for k in range(9):                                           # static unroll
        dy, dx = k // 3 - 1, k % 3 - 1
        tap = shifted(h1, dy * W + dx)
        if dy != 0 or dx != 0:                                   # center tap needs no mask
            tap = tap * mask_ref[k]                              # (F1, P) * (1, P)
        taps.append(tap)
    im2col = jnp.concatenate(taps, axis=0)                       # (9*F1, P) bf16

    h2 = jnp.dot(w2_ref[...], im2col, preferred_element_type=jnp.float32)   # (F2, P)
    h2 = jnp.maximum(h2 * s2_ref[...] + b2_ref[...], 0.0)
    h2 = h2.astype(jnp.bfloat16)

    # ---- conv3 (1x1, bias=False) + BN3 ----------------------------------------
    h3 = jnp.dot(w3_ref[...], h2, preferred_element_type=jnp.float32)        # (F3, P)
    h3 = h3 * s3_ref[...] + b3_ref[...]

    # ---- residual add (+ optional final ReLU) ---------------------------------
    # Re-read x here instead of keeping an f32 copy live across all three convs.
    out = h3 + x_ref[0]
    if final_relu:
        out = jnp.maximum(out, 0.0)
    o_ref[0] = out.astype(o_ref.dtype)                           # lane-dense store (F3, P)


def _conv3x3_boundary_masks(H, W):
    """(9, 1, H*W) bf16 {0,1} masks: tap k = ky*3+kx is valid at output pixel (y, x)
    iff source pixel (y+ky-1, x+kx-1) lies inside the image (the 'padding=1' zeros)."""
    P = H * W
    yy = jnp.broadcast_to(jnp.arange(H)[:, None], (H, W)).reshape(1, P)
    xx = jnp.broadcast_to(jnp.arange(W)[None, :], (H, W)).reshape(1, P)
    masks = []
    for k in range(9):
        dy, dx = k // 3 - 1, k % 3 - 1
        valid = ((yy + dy >= 0) & (yy + dy < H) &
                 (xx + dx >= 0) & (xx + dx < W))
        masks.append(valid)
    return jnp.stack(masks, axis=0).astype(jnp.bfloat16)         # (9, 1, P)


def identity_block(x, w1, w2, w3, s1, b1, s2, b2, s3, b3, *, final_relu=True):
    """Fused IdentityBlock forward.

    x:  (N, C, H, W) float32 (PyTorch NCHW layout).
    w1: (F1, C, 1, 1), w2: (F2, F1, 3, 3), w3: (F3, F2, 1, 1)  (OIHW, bias=False).
    s*/b*: (F,) BatchNorm running stats folded to per-channel scale/shift.
    """
    N, C, H, W = x.shape
    F1, F2, F3 = w1.shape[0], w2.shape[0], w3.shape[0]
    assert F3 == C, "identity block requires filters3 == in_planes"
    P = H * W

    # Channels-first, spatially-flattened operands (lane axis = H*W).
    x_flat = x.reshape(N, C, P)
    w1_2d = w1.reshape(F1, C).astype(jnp.bfloat16)
    # (F2, F1, ky, kx) -> (F2, ky, kx, F1) -> (F2, 9*F1): column (k*F1 + f1) matches
    # the im2col row order built in the kernel.
    w2_2d = jnp.transpose(w2, (0, 2, 3, 1)).reshape(F2, 9 * F1).astype(jnp.bfloat16)
    w3_2d = w3.reshape(F3, F2).astype(jnp.bfloat16)
    masks = _conv3x3_boundary_masks(H, W)

    bn = lambda v, f: v.reshape(f, 1).astype(jnp.float32)        # (F, 1) for (F, P) broadcast
    s1c, b1c = bn(s1, F1), bn(b1, F1)
    s2c, b2c = bn(s2, F2), bn(b2, F2)
    s3c, b3c = bn(s3, F3), bn(b3, F3)

    kernel = functools.partial(identity_block_kernel, H=H, W=W, final_relu=final_relu)

    def full(shape):
        return pl.BlockSpec(shape, lambda n, _r=len(shape): (0,) * _r)

    out_flat = pl.pallas_call(
        kernel,
        out_shape=jax.ShapeDtypeStruct((N, F3, P), x.dtype),
        grid_spec=pltpu.PrefetchScalarGridSpec(
            num_scalar_prefetch=0,
            grid=(N,),
            in_specs=[
                pl.BlockSpec((1, C, P), lambda n: (n, 0, 0)),
                full((F1, C)), full((F1, 1)), full((F1, 1)),
                full((F2, 9 * F1)), full((F2, 1)), full((F2, 1)),
                full((F3, F2)), full((F3, 1)), full((F3, 1)),
                full((9, 1, P)),
            ],
            out_specs=pl.BlockSpec((1, F3, P), lambda n: (n, 0, 0)),
        ),
        compiler_params=pltpu.CompilerParams(dimension_semantics=("parallel",)),
    )(x_flat, w1_2d, s1c, b1c, w2_2d, s2c, b2c, w3_2d, s3c, b3c, masks)
    return out_flat.reshape(N, F3, H, W)


def folded_bn_params(key, f, eps=1e-5):
    """Deterministic BatchNorm2d (eval mode) params folded to per-channel scale/shift."""
    kg, kb, km, kv = jax.random.split(key, 4)
    gamma = 1.0 + 0.1 * jax.random.normal(kg, (f,), jnp.float32)
    beta = 0.1 * jax.random.normal(kb, (f,), jnp.float32)
    running_mean = 0.1 * jax.random.normal(km, (f,), jnp.float32)
    running_var = jnp.abs(jax.random.normal(kv, (f,), jnp.float32)) + 0.5
    scale = gamma / jnp.sqrt(running_var + eps)
    shift = beta - running_mean * scale
    return scale, shift


def reference_forward(x, w1, w2, w3, s1, b1, s2, b2, s3, b3, final_relu=True):
    """Pure-JAX NCHW reference using the same mixed precision as the kernel
    (bf16 conv operands, f32 accumulation, f32 BN/ReLU/residual)."""
    dn = ("NCHW", "OIHW", "NCHW")

    def conv(h, w, pad):
        return lax.conv_general_dilated(
            h.astype(jnp.bfloat16), w.astype(jnp.bfloat16), (1, 1), pad,
            dimension_numbers=dn, preferred_element_type=jnp.float32)

    def bnorm(h, s, b):
        return h * s.reshape(1, -1, 1, 1) + b.reshape(1, -1, 1, 1)

    h = jax.nn.relu(bnorm(conv(x, w1, "VALID"), s1, b1))
    h = jax.nn.relu(bnorm(conv(h, w2, ((1, 1), (1, 1))), s2, b2))
    h = bnorm(conv(h, w3, "VALID"), s3, b3)
    out = h + x
    if final_relu:
        out = jax.nn.relu(out)
    return out


if __name__ == "__main__":
    # IdentityBlock(in_planes=4, filters=(8, 8, 4), kernel_size=3), NCHW input.
    N, C, H, W = 2, 4, 16, 16
    F1, F2, F3 = 8, 8, 4

    key = jax.random.PRNGKey(0)
    kx, kw1, kw2, kw3, kb1, kb2, kb3 = jax.random.split(key, 7)

    x = jax.random.normal(kx, (N, C, H, W), jnp.float32)
    w1 = 0.3 * jax.random.normal(kw1, (F1, C, 1, 1), jnp.float32)     # conv1 1x1 (OIHW)
    w2 = 0.1 * jax.random.normal(kw2, (F2, F1, 3, 3), jnp.float32)    # conv2 3x3 (OIHW)
    w3 = 0.3 * jax.random.normal(kw3, (F3, F2, 1, 1), jnp.float32)    # conv3 1x1 (OIHW)
    s1, b1 = folded_bn_params(kb1, F1)
    s2, b2 = folded_bn_params(kb2, F2)
    s3, b3 = folded_bn_params(kb3, F3)

    out = identity_block(x, w1, w2, w3, s1, b1, s2, b2, s3, b3, final_relu=True)
    out = jax.block_until_ready(out)

    ref = reference_forward(x, w1, w2, w3, s1, b1, s2, b2, s3, b3, final_relu=True)
    assert out.shape == (N, F3, H, W)
    assert jnp.allclose(out, ref, atol=1e-2, rtol=1e-2), "mismatch vs JAX reference"

    print("KERNEL_OK")
</pallas_src>

<mosaic_0001>
module attributes {stable_mosaic.version = 11 : i64} {
  func.func @identity_block_kernel(%arg0: i32, %arg1: memref<1x4x256xf32, #tpu.memory_space<vmem>>, %arg2: memref<8x4xbf16, #tpu.memory_space<vmem>>, %arg3: memref<8x1xf32, #tpu.memory_space<vmem>>, %arg4: memref<8x1xf32, #tpu.memory_space<vmem>>, %arg5: memref<8x72xbf16, #tpu.memory_space<vmem>>, %arg6: memref<8x1xf32, #tpu.memory_space<vmem>>, %arg7: memref<8x1xf32, #tpu.memory_space<vmem>>, %arg8: memref<4x8xbf16, #tpu.memory_space<vmem>>, %arg9: memref<4x1xf32, #tpu.memory_space<vmem>>, %arg10: memref<4x1xf32, #tpu.memory_space<vmem>>, %arg11: memref<9x1x256xbf16, #tpu.memory_space<vmem>>, %arg12: memref<1x4x256xf32, #tpu.memory_space<vmem>>) attributes {dimension_semantics = [#tpu.dimension_semantics<parallel>], iteration_bounds = array<i64: 2>, scalar_prefetch = 0 : i64, scratch_operands = 0 : i64, tpu.core_type = #tpu.core_type<tc>, window_params = [{transform_indices = @transform_0, window_bounds = array<i64: 1, 4, 256>}, {pipeline_mode = #tpu.pipeline_mode<synchronous>, transform_indices = @transform_1, window_bounds = array<i64: 8, 4>}, {pipeline_mode = #tpu.pipeline_mode<synchronous>, transform_indices = @transform_2, window_bounds = array<i64: 8, 1>}, {pipeline_mode = #tpu.pipeline_mode<synchronous>, transform_indices = @transform_3, window_bounds = array<i64: 8, 1>}, {pipeline_mode = #tpu.pipeline_mode<synchronous>, transform_indices = @transform_4, window_bounds = array<i64: 8, 72>}, {pipeline_mode = #tpu.pipeline_mode<synchronous>, transform_indices = @transform_5, window_bounds = array<i64: 8, 1>}, {pipeline_mode = #tpu.pipeline_mode<synchronous>, transform_indices = @transform_6, window_bounds = array<i64: 8, 1>}, {pipeline_mode = #tpu.pipeline_mode<synchronous>, transform_indices = @transform_7, window_bounds = array<i64: 4, 8>}, {pipeline_mode = #tpu.pipeline_mode<synchronous>, transform_indices = @transform_8, window_bounds = array<i64: 4, 1>}, {pipeline_mode = #tpu.pipeline_mode<synchronous>, transform_indices = @transform_9, window_bounds = array<i64: 4, 1>}, {pipeline_mode = #tpu.pipeline_mode<synchronous>, transform_indices = @transform_10, window_bounds = array<i64: 9, 1, 256>}, {transform_indices = @transform_11, window_bounds = array<i64: 1, 4, 256>}]} {
    %c0 = arith.constant 0 : index
    %c0_0 = arith.constant 0 : index
    %c0_1 = arith.constant 0 : index
    %0 = vector.load %arg1[%c0, %c0_0, %c0_1] : memref<1x4x256xf32, #tpu.memory_space<vmem>>, vector<1x4x256xf32>
    %1 = vector.shape_cast %0 : vector<1x4x256xf32> to vector<4x256xf32>
    %2 = arith.truncf %1 : vector<4x256xf32> to vector<4x256xbf16>
    %c0_2 = arith.constant 0 : index
    %c0_3 = arith.constant 0 : index
    %3 = vector.load %arg2[%c0_2, %c0_3] : memref<8x4xbf16, #tpu.memory_space<vmem>>, vector<8x4xbf16>
    %cst = arith.constant dense<0.000000e+00> : vector<8x256xf32>
    %4 = tpu.matmul %3, %2, %cst {dimension_numbers = #tpu.dot_dimension_numbers<[1], [0], [0], [1], [0, 0, 1, 1], [], []>} : vector<8x4xbf16>, vector<4x256xbf16>, vector<8x256xf32> -> vector<8x256xf32>
    %c0_4 = arith.constant 0 : index
    %c0_5 = arith.constant 0 : index
    %5 = vector.load %arg3[%c0_4, %c0_5] : memref<8x1xf32, #tpu.memory_space<vmem>>, vector<8x1xf32>
    %6 = vector.broadcast %5 : vector<8x1xf32> to vector<8x256xf32>
    %7 = arith.mulf %4, %6 : vector<8x256xf32>
    %c0_6 = arith.constant 0 : index
    %c0_7 = arith.constant 0 : index
    %8 = vector.load %arg4[%c0_6, %c0_7] : memref<8x1xf32, #tpu.memory_space<vmem>>, vector<8x1xf32>
    %9 = vector.broadcast %8 : vector<8x1xf32> to vector<8x256xf32>
    %10 = arith.addf %7, %9 : vector<8x256xf32>
    %cst_8 = arith.constant 0.000000e+00 : f32
    %11 = vector.broadcast %cst_8 : f32 to vector<8x256xf32>
    %12 = arith.maximumf %10, %11 : vector<8x256xf32>
    %13 = arith.truncf %12 : vector<8x256xf32> to vector<8x256xbf16>
    %14 = vector.extract_strided_slice %13 {offsets = [0, 239], sizes = [8, 17], strides = [1, 1]} : vector<8x256xbf16> to vector<8x17xbf16>
    %15 = vector.extract_strided_slice %13 {offsets = [0, 0], sizes = [8, 239], strides = [1, 1]} : vector<8x256xbf16> to vector<8x239xbf16>
    %16 = tpu.concatenate %14, %15 in 1 : vector<8x17xbf16>, vector<8x239xbf16> -> vector<8x256xbf16>
    %c0_9 = arith.constant 0 : index
    %c0_10 = arith.constant 0 : index
    %c0_11 = arith.constant 0 : index
    %17 = vector.load %arg11[%c0_9, %c0_10, %c0_11] : memref<9x1x256xbf16, #tpu.memory_space<vmem>>, vector<1x1x256xbf16>
    %18 = vector.shape_cast %17 : vector<1x1x256xbf16> to vector<1x256xbf16>
    %19 = vector.broadcast %18 : vector<1x256xbf16> to vector<8x256xbf16>
    %20 = arith.mulf %16, %19 : vector<8x256xbf16>
    %21 = vector.extract_strided_slice %13 {offsets = [0, 240], sizes = [8, 16], strides = [1, 1]} : vector<8x256xbf16> to vector<8x16xbf16>
    %22 = vector.extract_strided_slice %13 {offsets = [0, 0], sizes = [8, 240], strides = [1, 1]} : vector<8x256xbf16> to vector<8x240xbf16>
    %23 = tpu.concatenate %21, %22 in 1 : vector<8x16xbf16>, vector<8x240xbf16> -> vector<8x256xbf16>
    %c1 = arith.constant 1 : index
    %c0_12 = arith.constant 0 : index
    %c0_13 = arith.constant 0 : index
    %24 = vector.load %arg11[%c1, %c0_12, %c0_13] : memref<9x1x256xbf16, #tpu.memory_space<vmem>>, vector<1x1x256xbf16>
    %25 = vector.shape_cast %24 : vector<1x1x256xbf16> to vector<1x256xbf16>
    %26 = vector.broadcast %25 : vector<1x256xbf16> to vector<8x256xbf16>
    %27 = arith.mulf %23, %26 : vector<8x256xbf16>
    %28 = vector.extract_strided_slice %13 {offsets = [0, 241], sizes = [8, 15], strides = [1, 1]} : vector<8x256xbf16> to vector<8x15xbf16>
    %29 = vector.extract_strided_slice %13 {offsets = [0, 0], sizes = [8, 241], strides = [1, 1]} : vector<8x256xbf16> to vector<8x241xbf16>
    %30 = tpu.concatenate %28, %29 in 1 : vector<8x15xbf16>, vector<8x241xbf16> -> vector<8x256xbf16>
    %c2 = arith.constant 2 : index
    %c0_14 = arith.constant 0 : index
    %c0_15 = arith.constant 0 : index
    %31 = vector.load %arg11[%c2, %c0_14, %c0_15] : memref<9x1x256xbf16, #tpu.memory_space<vmem>>, vector<1x1x256xbf16>
    %32 = vector.shape_cast %31 : vector<1x1x256xbf16> to vector<1x256xbf16>
    %33 = vector.broadcast %32 : vector<1x256xbf16> to vector<8x256xbf16>
    %34 = arith.mulf %30, %33 : vector<8x256xbf16>
    %35 = vector.extract_strided_slice %13 {offsets = [0, 255], sizes = [8, 1], strides = [1, 1]} : vector<8x256xbf16> to vector<8x1xbf16>
    %36 = vector.extract_strided_slice %13 {offsets = [0, 0], sizes = [8, 255], strides = [1, 1]} : vector<8x256xbf16> to vector<8x255xbf16>
    %37 = tpu.concatenate %35, %36 in 1 : vector<8x1xbf16>, vector<8x255xbf16> -> vector<8x256xbf16>
    %c3 = arith.constant 3 : index
    %c0_16 = arith.constant 0 : index
    %c0_17 = arith.constant 0 : index
    %38 = vector.load %arg11[%c3, %c0_16, %c0_17] : memref<9x1x256xbf16, #tpu.memory_space<vmem>>, vector<1x1x256xbf16>
    %39 = vector.shape_cast %38 : vector<1x1x256xbf16> to vector<1x256xbf16>
    %40 = vector.broadcast %39 : vector<1x256xbf16> to vector<8x256xbf16>
    %41 = arith.mulf %37, %40 : vector<8x256xbf16>
    %42 = vector.extract_strided_slice %13 {offsets = [0, 1], sizes = [8, 255], strides = [1, 1]} : vector<8x256xbf16> to vector<8x255xbf16>
    %43 = vector.extract_strided_slice %13 {offsets = [0, 0], sizes = [8, 1], strides = [1, 1]} : vector<8x256xbf16> to vector<8x1xbf16>
    %44 = tpu.concatenate %42, %43 in 1 : vector<8x255xbf16>, vector<8x1xbf16> -> vector<8x256xbf16>
    %c5 = arith.constant 5 : index
    %c0_18 = arith.constant 0 : index
    %c0_19 = arith.constant 0 : index
    %45 = vector.load %arg11[%c5, %c0_18, %c0_19] : memref<9x1x256xbf16, #tpu.memory_space<vmem>>, vector<1x1x256xbf16>
    %46 = vector.shape_cast %45 : vector<1x1x256xbf16> to vector<1x256xbf16>
    %47 = vector.broadcast %46 : vector<1x256xbf16> to vector<8x256xbf16>
    %48 = arith.mulf %44, %47 : vector<8x256xbf16>
    %49 = vector.extract_strided_slice %13 {offsets = [0, 15], sizes = [8, 241], strides = [1, 1]} : vector<8x256xbf16> to vector<8x241xbf16>
    %50 = vector.extract_strided_slice %13 {offsets = [0, 0], sizes = [8, 15], strides = [1, 1]} : vector<8x256xbf16> to vector<8x15xbf16>
    %51 = tpu.concatenate %49, %50 in 1 : vector<8x241xbf16>, vector<8x15xbf16> -> vector<8x256xbf16>
    %c6 = arith.constant 6 : index
    %c0_20 = arith.constant 0 : index
    %c0_21 = arith.constant 0 : index
    %52 = vector.load %arg11[%c6, %c0_20, %c0_21] : memref<9x1x256xbf16, #tpu.memory_space<vmem>>, vector<1x1x256xbf16>
    %53 = vector.shape_cast %52 : vector<1x1x256xbf16> to vector<1x256xbf16>
    %54 = vector.broadcast %53 : vector<1x256xbf16> to vector<8x256xbf16>
    %55 = arith.mulf %51, %54 : vector<8x256xbf16>
    %56 = vector.extract_strided_slice %13 {offsets = [0, 16], sizes = [8, 240], strides = [1, 1]} : vector<8x256xbf16> to vector<8x240xbf16>
    %57 = vector.extract_strided_slice %13 {offsets = [0, 0], sizes = [8, 16], strides = [1, 1]} : vector<8x256xbf16> to vector<8x16xbf16>
    %58 = tpu.concatenate %56, %57 in 1 : vector<8x240xbf16>, vector<8x16xbf16> -> vector<8x256xbf16>
    %c7 = arith.constant 7 : index
    %c0_22 = arith.constant 0 : index
    %c0_23 = arith.constant 0 : index
    %59 = vector.load %arg11[%c7, %c0_22, %c0_23] : memref<9x1x256xbf16, #tpu.memory_space<vmem>>, vector<1x1x256xbf16>
    %60 = vector.shape_cast %59 : vector<1x1x256xbf16> to vector<1x256xbf16>
    %61 = vector.broadcast %60 : vector<1x256xbf16> to vector<8x256xbf16>
    %62 = arith.mulf %58, %61 : vector<8x256xbf16>
    %63 = vector.extract_strided_slice %13 {offsets = [0, 17], sizes = [8, 239], strides = [1, 1]} : vector<8x256xbf16> to vector<8x239xbf16>
    %64 = vector.extract_strided_slice %13 {offsets = [0, 0], sizes = [8, 17], strides = [1, 1]} : vector<8x256xbf16> to vector<8x17xbf16>
    %65 = tpu.concatenate %63, %64 in 1 : vector<8x239xbf16>, vector<8x17xbf16> -> vector<8x256xbf16>
    %c8 = arith.constant 8 : index
    %c0_24 = arith.constant 0 : index
    %c0_25 = arith.constant 0 : index
    %66 = vector.load %arg11[%c8, %c0_24, %c0_25] : memref<9x1x256xbf16, #tpu.memory_space<vmem>>, vector<1x1x256xbf16>
    %67 = vector.shape_cast %66 : vector<1x1x256xbf16> to vector<1x256xbf16>
    %68 = vector.broadcast %67 : vector<1x256xbf16> to vector<8x256xbf16>
    %69 = arith.mulf %65, %68 : vector<8x256xbf16>
    %70 = tpu.concatenate %20, %27, %34, %41, %13, %48, %55, %62, %69 in 0 : vector<8x256xbf16>, vector<8x256xbf16>, vector<8x256xbf16>, vector<8x256xbf16>, vector<8x256xbf16>, vector<8x256xbf16>, vector<8x256xbf16>, vector<8x256xbf16>, vector<8x256xbf16> -> vector<72x256xbf16>
    %c0_26 = arith.constant 0 : index
    %c0_27 = arith.constant 0 : index
    %71 = vector.load %arg5[%c0_26, %c0_27] : memref<8x72xbf16, #tpu.memory_space<vmem>>, vector<8x72xbf16>
    %cst_28 = arith.constant dense<0.000000e+00> : vector<8x256xf32>
    %72 = tpu.matmul %71, %70, %cst_28 {dimension_numbers = #tpu.dot_dimension_numbers<[1], [0], [0], [1], [0, 0, 1, 1], [], []>} : vector<8x72xbf16>, vector<72x256xbf16>, vector<8x256xf32> -> vector<8x256xf32>
    %c0_29 = arith.constant 0 : index
    %c0_30 = arith.constant 0 : index
    %73 = vector.load %arg6[%c0_29, %c0_30] : memref<8x1xf32, #tpu.memory_space<vmem>>, vector<8x1xf32>
    %74 = vector.broadcast %73 : vector<8x1xf32> to vector<8x256xf32>
    %75 = arith.mulf %72, %74 : vector<8x256xf32>
    %c0_31 = arith.constant 0 : index
    %c0_32 = arith.constant 0 : index
    %76 = vector.load %arg7[%c0_31, %c0_32] : memref<8x1xf32, #tpu.memory_space<vmem>>, vector<8x1xf32>
    %77 = vector.broadcast %76 : vector<8x1xf32> to vector<8x256xf32>
    %78 = arith.addf %75, %77 : vector<8x256xf32>
    %cst_33 = arith.constant 0.000000e+00 : f32
    %79 = vector.broadcast %cst_33 : f32 to vector<8x256xf32>
    %80 = arith.maximumf %78, %79 : vector<8x256xf32>
    %81 = arith.truncf %80 : vector<8x256xf32> to vector<8x256xbf16>
    %c0_34 = arith.constant 0 : index
    %c0_35 = arith.constant 0 : index
    %82 = vector.load %arg8[%c0_34, %c0_35] : memref<4x8xbf16, #tpu.memory_space<vmem>>, vector<4x8xbf16>
    %cst_36 = arith.constant dense<0.000000e+00> : vector<4x256xf32>
    %83 = tpu.matmul %82, %81, %cst_36 {dimension_numbers = #tpu.dot_dimension_numbers<[1], [0], [0], [1], [0, 0, 1, 1], [], []>} : vector<4x8xbf16>, vector<8x256xbf16>, vector<4x256xf32> -> vector<4x256xf32>
    %c0_37 = arith.constant 0 : index
    %c0_38 = arith.constant 0 : index
    %84 = vector.load %arg9[%c0_37, %c0_38] : memref<4x1xf32, #tpu.memory_space<vmem>>, vector<4x1xf32>
    %85 = vector.broadcast %84 : vector<4x1xf32> to vector<4x256xf32>
    %86 = arith.mulf %83, %85 : vector<4x256xf32>
    %c0_39 = arith.constant 0 : index
    %c0_40 = arith.constant 0 : index
    %87 = vector.load %arg10[%c0_39, %c0_40] : memref<4x1xf32, #tpu.memory_space<vmem>>, vector<4x1xf32>
    %88 = vector.broadcast %87 : vector<4x1xf32> to vector<4x256xf32>
    %89 = arith.addf %86, %88 : vector<4x256xf32>
    %c0_41 = arith.constant 0 : index
    %c0_42 = arith.constant 0 : index
    %c0_43 = arith.constant 0 : index
    %90 = vector.load %arg1[%c0_41, %c0_42, %c0_43] : memref<1x4x256xf32, #tpu.memory_space<vmem>>, vector<1x4x256xf32>
    %91 = vector.shape_cast %90 : vector<1x4x256xf32> to vector<4x256xf32>
    %92 = arith.addf %89, %91 : vector<4x256xf32>
    %cst_44 = arith.constant 0.000000e+00 : f32
    %93 = vector.broadcast %cst_44 : f32 to vector<4x256xf32>
    %94 = arith.maximumf %92, %93 : vector<4x256xf32>
    %c0_45 = arith.constant 0 : index
    %c0_46 = arith.constant 0 : index
    %c0_47 = arith.constant 0 : index
    %95 = vector.load %arg12[%c0_45, %c0_46, %c0_47] : memref<1x4x256xf32, #tpu.memory_space<vmem>>, vector<1x4x256xf32>
    %96 = vector.shape_cast %95 : vector<1x4x256xf32> to vector<4x256xf32>
    %97 = vector.shape_cast %94 : vector<4x256xf32> to vector<1x4x256xf32>
    tpu.vector_store %arg12[%c0_45, %c0_46, %c0_47], %97 {strides = array<i32>} : memref<1x4x256xf32, #tpu.memory_space<vmem>>, vector<1x4x256xf32>,
    return
  }
  func.func @transform_0(%arg0: i32) -> (i32, i32, i32) {
    %c0_i32 = arith.constant 0 : i32
    %c0_i32_0 = arith.constant 0 : i32
    %c0_i32_1 = arith.constant 0 : i32
    return %arg0, %c0_i32, %c0_i32_0 : i32, i32, i32
  }
  func.func @transform_1(%arg0: i32) -> (i32, i32) {
    %c0_i32 = arith.constant 0 : i32
    %c0_i32_0 = arith.constant 0 : i32
    %c0_i32_1 = arith.constant 0 : i32
    return %c0_i32, %c0_i32_0 : i32, i32
  }
  func.func @transform_2(%arg0: i32) -> (i32, i32) {
    %c0_i32 = arith.constant 0 : i32
    %c0_i32_0 = arith.constant 0 : i32
    %c0_i32_1 = arith.constant 0 : i32
    return %c0_i32, %c0_i32_0 : i32, i32
  }
  func.func @transform_3(%arg0: i32) -> (i32, i32) {
    %c0_i32 = arith.constant 0 : i32
    %c0_i32_0 = arith.constant 0 : i32
    %c0_i32_1 = arith.constant 0 : i32
    return %c0_i32, %c0_i32_0 : i32, i32
  }
  func.func @transform_4(%arg0: i32) -> (i32, i32) {
    %c0_i32 = arith.constant 0 : i32
    %c0_i32_0 = arith.constant 0 : i32
    %c0_i32_1 = arith.constant 0 : i32
    return %c0_i32, %c0_i32_0 : i32, i32
  }
  func.func @transform_5(%arg0: i32) -> (i32, i32) {
    %c0_i32 = arith.constant 0 : i32
    %c0_i32_0 = arith.constant 0 : i32
    %c0_i32_1 = arith.constant 0 : i32
    return %c0_i32, %c0_i32_0 : i32, i32
  }
  func.func @transform_6(%arg0: i32) -> (i32, i32) {
    %c0_i32 = arith.constant 0 : i32
    %c0_i32_0 = arith.constant 0 : i32
    %c0_i32_1 = arith.constant 0 : i32
    return %c0_i32, %c0_i32_0 : i32, i32
  }
  func.func @transform_7(%arg0: i32) -> (i32, i32) {
    %c0_i32 = arith.constant 0 : i32
    %c0_i32_0 = arith.constant 0 : i32
    %c0_i32_1 = arith.constant 0 : i32
    return %c0_i32, %c0_i32_0 : i32, i32
  }
  func.func @transform_8(%arg0: i32) -> (i32, i32) {
    %c0_i32 = arith.constant 0 : i32
    %c0_i32_0 = arith.constant 0 : i32
    %c0_i32_1 = arith.constant 0 : i32
    return %c0_i32, %c0_i32_0 : i32, i32
  }
  func.func @transform_9(%arg0: i32) -> (i32, i32) {
    %c0_i32 = arith.constant 0 : i32
    %c0_i32_0 = arith.constant 0 : i32
    %c0_i32_1 = arith.constant 0 : i32
    return %c0_i32, %c0_i32_0 : i32, i32
  }
  func.func @transform_10(%arg0: i32) -> (i32, i32, i32) {
    %c0_i32 = arith.constant 0 : i32
    %c0_i32_0 = arith.constant 0 : i32
    %c0_i32_1 = arith.constant 0 : i32
    %c0_i32_2 = arith.constant 0 : i32
    return %c0_i32, %c0_i32_0, %c0_i32_1 : i32, i32, i32
  }
  func.func @transform_11(%arg0: i32) -> (i32, i32, i32) {
    %c0_i32 = arith.constant 0 : i32
    %c0_i32_0 = arith.constant 0 : i32
    %c0_i32_1 = arith.constant 0 : i32
    return %arg0, %c0_i32, %c0_i32_0 : i32, i32, i32
  }
}

</mosaic_0001>

<llo_original>
// kernel: tpu_custom_call.1
$region0: #{tpu_custom_call.1}
  #allocation0 [shape = 'u32[]', space=smem, size = 0x4, offset = 0x4, fixed_abs, tag = 'smem constant byte address 0x4 - core index']
  #allocation1 [shape = 'u32[72,128]{1,0:T(1,128)}', space=vmem, size = 0x9000, scoped, tag = 'internal scratch']
  %s0 = inlined_call_operand.vmem [shape: f32[2,4,256], index: 0, kind: input, shape index: {}]
  %s1 = inlined_call_operand.vmem [shape: bf16[8,4], index: 1, kind: input, shape index: {}]
  %s2 = inlined_call_operand.vmem [shape: f32[8,1], index: 2, kind: input, shape index: {}]
  %s3 = inlined_call_operand.vmem [shape: f32[8,1], index: 3, kind: input, shape index: {}]
  %s4 = inlined_call_operand.vmem [shape: bf16[8,72], index: 4, kind: input, shape index: {}]
  %s5 = inlined_call_operand.vmem [shape: f32[8,1], index: 5, kind: input, shape index: {}]
  %s6 = inlined_call_operand.vmem [shape: f32[8,1], index: 6, kind: input, shape index: {}]
  %s7 = inlined_call_operand.vmem [shape: bf16[4,8], index: 7, kind: input, shape index: {}]
  %s8 = inlined_call_operand.vmem [shape: f32[4,1], index: 8, kind: input, shape index: {}]
  %s9 = inlined_call_operand.vmem [shape: f32[4,1], index: 9, kind: input, shape index: {}]
  %s10 = inlined_call_operand.vmem [shape: bf16[9,1,256], index: 10, kind: input, shape index: {}]
  %s11 = inlined_call_operand.hbm [shape: f32[2,4,256], index: 11, kind: output, shape index: {}]
  %s12 = sld [smem:[#allocation0]]
  $region77: #{tpu_custom_call.1} parent=0
    _
  %s14 = ssub.s32 1, %s12
  %s15 = scalar_select 0, %s14, %s12
  $region1: #{tpu_custom_call.1} parent=0
    #allocation2 [shape = 'u8[8192]{0}', space=vmem, size = 0x2000, scoped, tag = 'output window, operand 0']
    #allocation3 [shape = 's32[2]{0}', space=sflag, size = 0x8, scoped, tag = 'scoped memory for tpu_custom_call.1']
    %16 = vsyncpa [#allocation3], 0
    %s17 = scalar_lea.sflag [#allocation3], 1
    %18 = vsyncpa %s17, 0
    loop: start=0, step=1, limit=4
    $region2: #{tpu_custom_call.1} parent=1 // loop_pre_header
      _
    $region3: #{tpu_custom_call.1} parent=1 // loop_header
      %s20 = sphi 0, %s24
      %p21 = scmp.ge.s32.totalorder %s20, 4
      %s30 = sphi 0, %s32
      %s33 = sphi 0, %s30
      %s34 = sphi 0, %s33
      %s50 = sphi 0, %s34
      %s54 = sphi 0, %s54
      %s56 = sphi 0, %s54
      %s57 = sphi 0, %s56
      %s71 = sphi 0, %s57
      %s75 = sphi 0, %s75
      %s77 = sphi 0, %s75
      %s78 = sphi 0, %s77
      %s92 = sphi 0, %s78
      %s96 = sphi 0, %s96
      %s98 = sphi 0, %s96
      %s99 = sphi 0, %s98
      %s113 = sphi 0, %s99
      %s117 = sphi 0, %s117
      %s119 = sphi 0, %s117
      %s120 = sphi 0, %s119
      %s134 = sphi 0, %s120
      %s138 = sphi 0, %s138
      %s140 = sphi 0, %s138
      %s141 = sphi 0, %s140
      %s155 = sphi 0, %s141
      %s159 = sphi 0, %s159
      %s161 = sphi 0, %s159
      %s162 = sphi 0, %s161
      %s176 = sphi 0, %s162
      %s180 = sphi 0, %s180
      %s182 = sphi 0, %s180
      %s183 = sphi 0, %s182
      %s197 = sphi 0, %s183
      %s201 = sphi 0, %s201
      %s203 = sphi 0, %s201
      %s204 = sphi 0, %s203
      %s218 = sphi 0, %s204
      %s222 = sphi 0, %s222
      %s224 = sphi 0, %s222
      %s225 = sphi 0, %s224
      %s239 = sphi 0, %s225
      %s243 = sphi 0, %s243
      %s245 = sphi 0, %s243
      %s246 = sphi 0, %s245
      %s260 = sphi 0, %s246
      %s266 = sphi 0, %s268
      %s269 = sphi 0, %s266
      %s270 = sphi 0, %s269
      %s286 = sphi 0, %s270
    $region4: #{tpu_custom_call.1} parent=1 // loop_header_branch
      %23 = sbr.rel (%p21) target = $region8
    $region5: #{tpu_custom_call.1} parent=1 // loop_body
      %s25 = ssub.s32 %s20, 1
      %s26 = ssub.s32 %s20, 2
      %s27 = sadd.s32 %s20, 1
      %s28 = ssub.s32 %s20, %s27
      %p29 = scmp.eq.s32.totalorder %s28, 0
      %s31 = sadd.s32 %s30, 1
      %s32 = scalar_select %p29, %s30, %s31
      %p35 = pneg %p29
      %p36 = scmp.eq.s32.totalorder %s20, 1
      %p37 = por %p35, %p36
      %p38 = scmp.ne.s32.totalorder %s30, %s33
      %p39 = scmp.eq.s32.totalorder %s20, 0
      %p40 = por %p38, %p39
      %p41 = scmp.ne.s32.totalorder %s30, %s33
      %p42 = scmp.eq.s32.totalorder %s25, 1
      %p43 = por %p41, %p42
      %p44 = scmp.ne.s32.totalorder %s33, %s34
      %p45 = scmp.eq.s32.totalorder %s25, 0
      %p46 = por %p44, %p45
      %p47 = scmp.ne.s32.totalorder %s33, %s34
      %p48 = scmp.eq.s32.totalorder %s26, 1
      %p49 = por %p47, %p48
      %p51 = scmp.ne.s32.totalorder %s34, %s50
      %p52 = scmp.eq.s32.totalorder %s26, 0
      %p53 = por %p51, %p52
      %s55 = sadd.s32 %s54, 1
      %p58 = scmp.eq.s32.totalorder %s20, 1
      %p59 = scmp.ne.s32.totalorder %s54, %s56
      %p60 = scmp.eq.s32.totalorder %s20, 0
      %p61 = por %p59, %p60
      %p62 = scmp.ne.s32.totalorder %s54, %s56
      %p63 = scmp.eq.s32.totalorder %s25, 1
      %p64 = por %p62, %p63
      %p65 = scmp.ne.s32.totalorder %s56, %s57
      %p66 = scmp.eq.s32.totalorder %s25, 0
      %p67 = por %p65, %p66
      %p68 = scmp.ne.s32.totalorder %s56, %s57
      %p69 = scmp.eq.s32.totalorder %s26, 1
      %p70 = por %p68, %p69
      %p72 = scmp.ne.s32.totalorder %s57, %s71
      %p73 = scmp.eq.s32.totalorder %s26, 0
      %p74 = por %p72, %p73
      %s76 = sadd.s32 %s75, 1
      %p79 = scmp.eq.s32.totalorder %s20, 1
      %p80 = scmp.ne.s32.totalorder %s75, %s77
      %p81 = scmp.eq.s32.totalorder %s20, 0
      %p82 = por %p80, %p81
      %p83 = scmp.ne.s32.totalorder %s75, %s77
      %p84 = scmp.eq.s32.totalorder %s25, 1
      %p85 = por %p83, %p84
      %p86 = scmp.ne.s32.totalorder %s77, %s78
      %p87 = scmp.eq.s32.totalorder %s25, 0
      %p88 = por %p86, %p87
      %p89 = scmp.ne.s32.totalorder %s77, %s78
      %p90 = scmp.eq.s32.totalorder %s26, 1
      %p91 = por %p89, %p90
      %p93 = scmp.ne.s32.totalorder %s78, %s92
      %p94 = scmp.eq.s32.totalorder %s26, 0
      %p95 = por %p93, %p94
      %s97 = sadd.s32 %s96, 1
      %p100 = scmp.eq.s32.totalorder %s20, 1
      %p101 = scmp.ne.s32.totalorder %s96, %s98
      %p102 = scmp.eq.s32.totalorder %s20, 0
      %p103 = por %p101, %p102
      %p104 = scmp.ne.s32.totalorder %s96, %s98
      %p105 = scmp.eq.s32.totalorder %s25, 1
      %p106 = por %p104, %p105
      %p107 = scmp.ne.s32.totalorder %s98, %s99
      %p108 = scmp.eq.s32.totalorder %s25, 0
      %p109 = por %p107, %p108
      %p110 = scmp.ne.s32.totalorder %s98, %s99
      %p111 = scmp.eq.s32.totalorder %s26, 1
      %p112 = por %p110, %p111
      %p114 = scmp.ne.s32.totalorder %s99, %s113
      %p115 = scmp.eq.s32.totalorder %s26, 0
      %p116 = por %p114, %p115
      %s118 = sadd.s32 %s117, 1
      %p121 = scmp.eq.s32.totalorder %s20, 1
      %p122 = scmp.ne.s32.totalorder %s117, %s119
      %p123 = scmp.eq.s32.totalorder %s20, 0
      %p124 = por %p122, %p123
      %p125 = scmp.ne.s32.totalorder %s117, %s119
      %p126 = scmp.eq.s32.totalorder %s25, 1
      %p127 = por %p125, %p126
      %p128 = scmp.ne.s32.totalorder %s119, %s120
      %p129 = scmp.eq.s32.totalorder %s25, 0
      %p130 = por %p128, %p129
      %p131 = scmp.ne.s32.totalorder %s119, %s120
      %p132 = scmp.eq.s32.totalorder %s26, 1
      %p133 = por %p131, %p132
      %p135 = scmp.ne.s32.totalorder %s120, %s134
      %p136 = scmp.eq.s32.totalorder %s26, 0
      %p137 = por %p135, %p136
      %s139 = sadd.s32 %s138, 1
      %p142 = scmp.eq.s32.totalorder %s20, 1
      %p143 = scmp.ne.s32.totalorder %s138, %s140
      %p144 = scmp.eq.s32.totalorder %s20, 0
      %p145 = por %p143, %p144
      %p146 = scmp.ne.s32.totalorder %s138, %s140
      %p147 = scmp.eq.s32.totalorder %s25, 1
      %p148 = por %p146, %p147
      %p149 = scmp.ne.s32.totalorder %s140, %s141
      %p150 = scmp.eq.s32.totalorder %s25, 0
      %p151 = por %p149, %p150
      %p152 = scmp.ne.s32.totalorder %s140, %s141
      %p153 = scmp.eq.s32.totalorder %s26, 1
      %p154 = por %p152, %p153
      %p156 = scmp.ne.s32.totalorder %s141, %s155
      %p157 = scmp.eq.s32.totalorder %s26, 0
      %p158 = por %p156, %p157
      %s160 = sadd.s32 %s159, 1
      %p163 = scmp.eq.s32.totalorder %s20, 1
      %p164 = scmp.ne.s32.totalorder %s159, %s161
      %p165 = scmp.eq.s32.totalorder %s20, 0
      %p166 = por %p164, %p165
      %p167 = scmp.ne.s32.totalorder %s159, %s161
      %p168 = scmp.eq.s32.totalorder %s25, 1
      %p169 = por %p167, %p168
      %p170 = scmp.ne.s32.totalorder %s161, %s162
      %p171 = scmp.eq.s32.totalorder %s25, 0
      %p172 = por %p170, %p171
      %p173 = scmp.ne.s32.totalorder %s161, %s162
      %p174 = scmp.eq.s32.totalorder %s26, 1
      %p175 = por %p173, %p174
      %p177 = scmp.ne.s32.totalorder %s162, %s176
      %p178 = scmp.eq.s32.totalorder %s26, 0
      %p179 = por %p177, %p178
      %s181 = sadd.s32 %s180, 1
      %p184 = scmp.eq.s32.totalorder %s20, 1
      %p185 = scmp.ne.s32.totalorder %s180, %s182
      %p186 = scmp.eq.s32.totalorder %s20, 0
      %p187 = por %p185, %p186
      %p188 = scmp.ne.s32.totalorder %s180, %s182
      %p189 = scmp.eq.s32.totalorder %s25, 1
      %p190 = por %p188, %p189
      %p191 = scmp.ne.s32.totalorder %s182, %s183
      %p192 = scmp.eq.s32.totalorder %s25, 0
      %p193 = por %p191, %p192
      %p194 = scmp.ne.s32.totalorder %s182, %s183
      %p195 = scmp.eq.s32.totalorder %s26, 1
      %p196 = por %p194, %p195
      %p198 = scmp.ne.s32.totalorder %s183, %s197
      %p199 = scmp.eq.s32.totalorder %s26, 0
      %p200 = por %p198, %p199
      %s202 = sadd.s32 %s201, 1
      %p205 = scmp.eq.s32.totalorder %s20, 1
      %p206 = scmp.ne.s32.totalorder %s201, %s203
      %p207 = scmp.eq.s32.totalorder %s20, 0
      %p208 = por %p206, %p207
      %p209 = scmp.ne.s32.totalorder %s201, %s203
      %p210 = scmp.eq.s32.totalorder %s25, 1
      %p211 = por %p209, %p210
      %p212 = scmp.ne.s32.totalorder %s203, %s204
      %p213 = scmp.eq.s32.totalorder %s25, 0
      %p214 = por %p212, %p213
      %p215 = scmp.ne.s32.totalorder %s203, %s204
      %p216 = scmp.eq.s32.totalorder %s26, 1
      %p217 = por %p215, %p216
      %p219 = scmp.ne.s32.totalorder %s204, %s218
      %p220 = scmp.eq.s32.totalorder %s26, 0
      %p221 = por %p219, %p220
      %s223 = sadd.s32 %s222, 1
      %p226 = scmp.eq.s32.totalorder %s20, 1
      %p227 = scmp.ne.s32.totalorder %s222, %s224
      %p228 = scmp.eq.s32.totalorder %s20, 0
      %p229 = por %p227, %p228
      %p230 = scmp.ne.s32.totalorder %s222, %s224
      %p231 = scmp.eq.s32.totalorder %s25, 1
      %p232 = por %p230, %p231
      %p233 = scmp.ne.s32.totalorder %s224, %s225
      %p234 = scmp.eq.s32.totalorder %s25, 0
      %p235 = por %p233, %p234
      %p236 = scmp.ne.s32.totalorder %s224, %s225
      %p237 = scmp.eq.s32.totalorder %s26, 1
      %p238 = por %p236, %p237
      %p240 = scmp.ne.s32.totalorder %s225, %s239
      %p241 = scmp.eq.s32.totalorder %s26, 0
      %p242 = por %p240, %p241
      %s244 = sadd.s32 %s243, 1
      %p247 = scmp.eq.s32.totalorder %s20, 1
      %p248 = scmp.ne.s32.totalorder %s243, %s245
      %p249 = scmp.eq.s32.totalorder %s20, 0
      %p250 = por %p248, %p249
      %p251 = scmp.ne.s32.totalorder %s243, %s245
      %p252 = scmp.eq.s32.totalorder %s25, 1
      %p253 = por %p251, %p252
      %p254 = scmp.ne.s32.totalorder %s245, %s246
      %p255 = scmp.eq.s32.totalorder %s25, 0
      %p256 = por %p254, %p255
      %p257 = scmp.ne.s32.totalorder %s245, %s246
      %p258 = scmp.eq.s32.totalorder %s26, 1
      %p259 = por %p257, %p258
      %p261 = scmp.ne.s32.totalorder %s246, %s260
      %p262 = scmp.eq.s32.totalorder %s26, 0
      %p263 = por %p261, %p262
      %s264 = ssub.s32 %s20, %s27
      %p265 = scmp.eq.s32.totalorder %s264, 0
      %s267 = sadd.s32 %s266, 1
      %s268 = scalar_select %p265, %s266, %s267
      %p271 = pneg %p265
      %p272 = scmp.eq.s32.totalorder %s20, 1
      %p273 = por %p271, %p272
      %p274 = scmp.ne.s32.totalorder %s266, %s269
      %p275 = scmp.eq.s32.totalorder %s20, 0
      %p276 = por %p274, %p275
      %p277 = scmp.ne.s32.totalorder %s266, %s269
      %p278 = scmp.eq.s32.totalorder %s25, 1
      %p279 = por %p277, %p278
      %p280 = scmp.ne.s32.totalorder %s269, %s270
      %p281 = scmp.eq.s32.totalorder %s25, 0
      %p282 = por %p280, %p281
      %p283 = scmp.ne.s32.totalorder %s269, %s270
      %p284 = scmp.eq.s32.totalorder %s26, 1
      %p285 = por %p283, %p284
      %p287 = scmp.ne.s32.totalorder %s270, %s286
      %p288 = scmp.eq.s32.totalorder %s26, 0
      %p289 = por %p287, %p288
      %p290 = scmp.le.s32.totalorder 1, %s20
      %p291 = scmp.lt.s32.totalorder %s20, 3
      %p292 = pnand %p290, %p291
      %p293 = pneg %p292
      // Predicated region
      $region9: #{tpu_custom_call.1} parent=5 // pred_check
        _
      $region10: #{tpu_custom_call.1} parent=5 // pred_check_branch
        %295 = sbr.rel (%p292) target = $region12
      $region11: #{tpu_custom_call.1} parent=5 // pred_region
        %s296 = ssub.s32 %s20, 1
        // Predicated region
        $region13: #{tpu_custom_call.1} parent=11 // pred_check
          %p297 = pneg %p67
        $region14: #{tpu_custom_call.1} parent=11 // pred_check_branch
          %299 = sbr.rel (%p297) target = $region16
        $region15: #{tpu_custom_call.1} parent=11 // pred_region
          _
        $region16: #{tpu_custom_call.1} parent=11 // pred_fallthru
          _
        // Predicated region
        $region17: #{tpu_custom_call.1} parent=11 // pred_check
          %p300 = pneg %p88
        $region18: #{tpu_custom_call.1} parent=11 // pred_check_branch
          %302 = sbr.rel (%p300) target = $region20
        $region19: #{tpu_custom_call.1} parent=11 // pred_region
          _
        $region20: #{tpu_custom_call.1} parent=11 // pred_fallthru
          _
        // Predicated region
        $region21: #{tpu_custom_call.1} parent=11 // pred_check
          %p303 = pneg %p109
        $region22: #{tpu_custom_call.1} parent=11 // pred_check_branch
          %305 = sbr.rel (%p303) target = $region24
        $region23: #{tpu_custom_call.1} parent=11 // pred_region
          _
        $region24: #{tpu_custom_call.1} parent=11 // pred_fallthru
          _
        // Predicated region
        $region25: #{tpu_custom_call.1} parent=11 // pred_check
          %p306 = pneg %p130
        $region26: #{tpu_custom_call.1} parent=11 // pred_check_branch
          %308 = sbr.rel (%p306) target = $region28
        $region27: #{tpu_custom_call.1} parent=11 // pred_region
          _
        $region28: #{tpu_custom_call.1} parent=11 // pred_fallthru
          _
        // Predicated region
        $region29: #{tpu_custom_call.1} parent=11 // pred_check
          %p309 = pneg %p151
        $region30: #{tpu_custom_call.1} parent=11 // pred_check_branch
          %311 = sbr.rel (%p309) target = $region32
        $region31: #{tpu_custom_call.1} parent=11 // pred_region
          _
        $region32: #{tpu_custom_call.1} parent=11 // pred_fallthru
          _
        // Predicated region
        $region33: #{tpu_custom_call.1} parent=11 // pred_check
          %p312 = pneg %p172
        $region34: #{tpu_custom_call.1} parent=11 // pred_check_branch
          %314 = sbr.rel (%p312) target = $region36
        $region35: #{tpu_custom_call.1} parent=11 // pred_region
          _
        $region36: #{tpu_custom_call.1} parent=11 // pred_fallthru
          _
        // Predicated region
        $region37: #{tpu_custom_call.1} parent=11 // pred_check
          %p315 = pneg %p193
        $region38: #{tpu_custom_call.1} parent=11 // pred_check_branch
          %317 = sbr.rel (%p315) target = $region40
        $region39: #{tpu_custom_call.1} parent=11 // pred_region
          _
        $region40: #{tpu_custom_call.1} parent=11 // pred_fallthru
          _
        // Predicated region
        $region41: #{tpu_custom_call.1} parent=11 // pred_check
          %p318 = pneg %p214
        $region42: #{tpu_custom_call.1} parent=11 // pred_check_branch
          %320 = sbr.rel (%p318) target = $region44
        $region43: #{tpu_custom_call.1} parent=11 // pred_region
          _
        $region44: #{tpu_custom_call.1} parent=11 // pred_fallthru
          _
        // Predicated region
        $region45: #{tpu_custom_call.1} parent=11 // pred_check
          %p321 = pneg %p235
        $region46: #{tpu_custom_call.1} parent=11 // pred_check_branch
          %323 = sbr.rel (%p321) target = $region48
        $region47: #{tpu_custom_call.1} parent=11 // pred_region
          _
        $region48: #{tpu_custom_call.1} parent=11 // pred_fallthru
          _
        // Predicated region
        $region49: #{tpu_custom_call.1} parent=11 // pred_check
          %p324 = pneg %p256
        $region50: #{tpu_custom_call.1} parent=11 // pred_check_branch
          %326 = sbr.rel (%p324) target = $region52
        $region51: #{tpu_custom_call.1} parent=11 // pred_region
          _
        $region52: #{tpu_custom_call.1} parent=11 // pred_fallthru
          _
      $region12: #{tpu_custom_call.1} parent=5 // pred_fallthru
        _
      %p327 = scmp.lt.s32.totalorder %s20, 2
      // Predicated region
      $region53: #{tpu_custom_call.1} parent=5 // pred_check
        %p328 = pneg %p327
      $region54: #{tpu_custom_call.1} parent=5 // pred_check_branch
        %330 = sbr.rel (%p328) target = $region56
      $region55: #{tpu_custom_call.1} parent=5 // pred_region
        // Predicated region
        $region57: #{tpu_custom_call.1} parent=55 // pred_check
          %p331 = pneg %p40
        $region58: #{tpu_custom_call.1} parent=55 // pred_check_branch
          %333 = sbr.rel (%p331) target = $region60
        $region59: #{tpu_custom_call.1} parent=55 // pred_region
          %p334 = scmp.lt.s32.totalorder %s20, 1
          %s335 = scalar_select %p334, %s20, 1
          %s336 = smul.addr %s335, 2
          %s337 = smul.addr %s336, 4
          %s338 = scalar_lea.vmem %s0, %s337
        $region60: #{tpu_custom_call.1} parent=55 // pred_fallthru
          _
      $region56: #{tpu_custom_call.1} parent=5 // pred_fallthru
        _
      %p339 = scmp.le.s32.totalorder 1, %s20
      %p340 = scmp.lt.s32.totalorder %s20, 3
      %p341 = pnand %p339, %p340
      %p342 = pneg %p341
      // Predicated region
      $region61: #{tpu_custom_call.1} parent=5 // pred_check
        _
      $region62: #{tpu_custom_call.1} parent=5 // pred_check_branch
        %344 = sbr.rel (%p341) target = $region64
      $region63: #{tpu_custom_call.1} parent=5 // pred_region
        %s345 = ssub.s32 %s20, 1
        %p346 = scmp.lt.s32.totalorder %s25, 1
        %s347 = scalar_select %p346, %s25, 1
        %s348 = smul.addr %s347, 2
        %s349 = smul.addr %s348, 4
        %s350 = scalar_lea.vmem %s0, %s349
        %p351 = pneg %p46
        %p352 = pneg %p43
        %p353 = pneg %p67
        %p354 = pneg %p64
        %p355 = pneg %p88
        %p356 = pneg %p85
        %p357 = pneg %p109
        %p358 = pneg %p106
        %p359 = pneg %p130
        %p360 = pneg %p127
        %p361 = pneg %p151
        %p362 = pneg %p148
        %p363 = pneg %p172
        %p364 = pneg %p169
        %p365 = pneg %p193
        %p366 = pneg %p190
        %p367 = pneg %p214
        %p368 = pneg %p211
        %p369 = pneg %p235
        %p370 = pneg %p232
        %p371 = pneg %p256
        %p372 = pneg %p253
        %p373 = pneg %p282
        %p374 = pneg %p279
        %s375 = sand.u32 %s269, 1
        %s376 = scalar_lea.sflag [#allocation3], %s375
        %s377 = sand.u32 %s269, 1
        %s378 = smul.addr %s377, 8
        %s379 = scalar_lea.vmem [#allocation2], %s378
        %p380 = scmp.lt.s32.totalorder %s25, 1
        %s381 = scalar_select %p380, %s25, 1
        %s382 = smul.addr %s381, 2
        %s383 = smul.addr %s382, 4
        %s384 = scalar_lea.vmem %s0, %s383
        %v386 = vld [vmem:[%s384] sm:$0xff]
        %388 = vst [vmem:[#allocation1] ss:$2 sm:$0xff] %v386
        %v389 = vld.sshfl [vmem:[#allocation1] sm:$0xff pattern:$0x75316420]
        %v390 = vld.sshfl [vmem:[#allocation1 + $0x8] sm:$0xff pattern:$0x75316420]
        %v393 = vpack.c.bf16 %v389, %v389
        %v394 = vpack.c.bf16 %v390, %v390
        %v395 = vld [vmem:[%s1] sm:$0xf]
        %vm396 = vcmask 31744
        %v398 = vsel %vm396, %v395, 0
        %vm400 = vcmask 1041408
        %v402 = vsel %vm400, %v393, 0
        %v405 = vsel %vm400, %v394, 0
        %407 = vmatpush.bf16.msra.mxu0 0
        %408 = vmatpush.bf16.msra.mxu0 0
        %409 = vmatpush.bf16.msra.mxu0 0
        %410 = vmatpush.bf16.msra.mxu0 0
        %411 = vmatpush.bf16.msra.mxu0 0
        %412 = vmatpush.bf16.msra.mxu0 0
        %413 = vmatpush.bf16.msra.mxu0 0
        %414 = vmatpush.bf16.msra.mxu0 %v402
        %415 = vmatmul.bf16.gmra.mxu0 %v398
        %v416 = vpop.f32.mrf.mxu0
        %v417 = vadd.f32 0.0, %v416
        %v418 = vpop.f32.mrf.mxu0
        %419 = vdwg.mxu0
        %420 = vmatpush.bf16.msra.mxu0 0
        %421 = vmatpush.bf16.msra.mxu0 0
        %422 = vmatpush.bf16.msra.mxu0 0
        %423 = vmatpush.bf16.msra.mxu0 0
        %424 = vmatpush.bf16.msra.mxu0 0
        %425 = vmatpush.bf16.msra.mxu0 0
        %426 = vmatpush.bf16.msra.mxu0 0
        %427 = vmatpush.bf16.msra.mxu0 %v405
        %428 = vmatmul.bf16.gmra.mxu0 %v398
        %v429 = vpop.f32.mrf.mxu0
        %v430 = vadd.f32 0.0, %v429
        %v431 = vpop.f32.mrf.mxu0
        %432 = vdwg.mxu0
        %v433 = vld [vmem:[%s2] sm:$0xff]
        %435 = vset.pattern.permute.xlu0 0
        %436 = vperm.xlu0 %435, %v433
        %v437 = vpop.permute.xlu0 %436
        %v439 = vmul.f32 %v417, %v437
        %v440 = vmul.f32 %v430, %v437
        %v441 = vld [vmem:[%s3] sm:$0xff]
        %443 = vset.pattern.permute.xlu0 0
        %444 = vperm.xlu0 %443, %v441
        %v445 = vpop.permute.xlu0 %444
        %v447 = vadd.f32 %v439, %v445
        %v448 = vadd.f32 %v440, %v445
        %v449 = vmax.f32 %v447, 0.0
        %v450 = vmax.f32 %v448, 0.0
        %v451 = vpack.c.bf16 %v450, %v449
        %v453 = vunpack.c.h.b16 %v451
        %v454 = vpack.c.b16 %v453, %v453
        %455 = vrot.lane.b32.xlu0 %v454, 17
        %v456 = vpop.permute.xlu0 %455
        %v457 = vunpack.c.l.b16 %v451
        %v458 = vpack.c.b16 %v457, %v457
        %459 = vrot.lane.b32.xlu0 %v458, 17
        %v460 = vpop.permute.xlu0 %459
        %vm461 = vcmask 138240
        %v462 = vsel %vm461, %v460, %v456
        %vm464 = vcmask 138240
        %v467 = vsel %vm464, %v456, %v460
        %v469 = vld [vmem:[%s10] sm:$0x3]
        %471 = vst [vmem:[#allocation1] ss:$9 sm:$0xff] %v469
        %v472 = vld [vmem:[#allocation1] sm:$0xff]
        %v473 = vld [vmem:[#allocation1 + $0x9] sm:$0xff]
        %v474 = vpack.i.b16 %v472, %v472
        %v476 = vperm.slane %v474, 0
        %v477 = vpack.i.b16 %v473, %v473
        %v479 = vperm.slane %v477, 0
        %v480 = vunpack.c.l.bf16 %v467
        %v481 = vunpack.c.l.bf16 %v462
        %v482 = vunpack.c.l.bf16 %v476
        %v483 = vunpack.c.l.bf16 %v479
        %v484 = vmul.f32 %v480, %v482
        %v485 = vmul.f32 %v481, %v483
        %v486 = vpack.c.bf16 %v485, %v484
        %487 = vrot.lane.b32.xlu0 %v454, 16
        %v488 = vpop.permute.xlu0 %487
        %489 = vrot.lane.b32.xlu0 %v458, 16
        %v490 = vpop.permute.xlu0 %489
        %vm491 = vcmask 130048
        %v492 = vsel %vm491, %v490, %v488
        %vm494 = vcmask 130048
        %v497 = vsel %vm494, %v488, %v490
        %s499 = scalar_lea.vmem %s10, 2
        %v500 = vld [vmem:[%s499] sm:$0x3]
        %502 = vst [vmem:[#allocation1] ss:$9 sm:$0xff] %v500
        %v503 = vld [vmem:[#allocation1] sm:$0xff]
        %v504 = vld [vmem:[#allocation1 + $0x9] sm:$0xff]
        %v505 = vpack.i.b16 %v503, %v503
        %v507 = vperm.slane %v505, 0
        %v508 = vpack.i.b16 %v504, %v504
        %v510 = vperm.slane %v508, 0
        %v511 = vunpack.c.l.bf16 %v497
        %v512 = vunpack.c.l.bf16 %v492
        %v513 = vunpack.c.l.bf16 %v507
        %v514 = vunpack.c.l.bf16 %v510
        %v515 = vmul.f32 %v511, %v513
        %v516 = vmul.f32 %v512, %v514
        %v517 = vpack.c.bf16 %v516, %v515
        %518 = vrot.lane.b32.xlu0 %v454, 15
        %v519 = vpop.permute.xlu0 %518
        %520 = vrot.lane.b32.xlu0 %v458, 15
        %v521 = vpop.permute.xlu0 %520
        %vm522 = vcmask 121856
        %v523 = vsel %vm522, %v521, %v519
        %vm525 = vcmask 121856
        %v528 = vsel %vm525, %v519, %v521
        %s530 = scalar_lea.vmem %s10, 4
        %v531 = vld [vmem:[%s530] sm:$0x3]
        %533 = vst [vmem:[#allocation1] ss:$9 sm:$0xff] %v531
        %v534 = vld [vmem:[#allocation1] sm:$0xff]
        %v535 = vld [vmem:[#allocation1 + $0x9] sm:$0xff]
        %v536 = vpack.i.b16 %v534, %v534
        %v538 = vperm.slane %v536, 0
        %v539 = vpack.i.b16 %v535, %v535
        %v541 = vperm.slane %v539, 0
        %v542 = vunpack.c.l.bf16 %v528
        %v543 = vunpack.c.l.bf16 %v523
        %v544 = vunpack.c.l.bf16 %v538
        %v545 = vunpack.c.l.bf16 %v541
        %v546 = vmul.f32 %v542, %v544
        %v547 = vmul.f32 %v543, %v545
        %v548 = vpack.c.bf16 %v547, %v546
        %549 = vrot.lane.b32.xlu0 %v454, 1
        %v550 = vpop.permute.xlu0 %549
        %551 = vrot.lane.b32.xlu0 %v458, 1
        %v552 = vpop.permute.xlu0 %551
        %vm553 = vcmask 7168
        %v554 = vsel %vm553, %v552, %v550
        %vm556 = vcmask 7168
        %v559 = vsel %vm556, %v550, %v552
        %s561 = scalar_lea.vmem %s10, 6
        %v562 = vld [vmem:[%s561] sm:$0x3]
        %564 = vst [vmem:[#allocation1] ss:$9 sm:$0xff] %v562
        %v565 = vld [vmem:[#allocation1] sm:$0xff]
        %v566 = vld [vmem:[#allocation1 + $0x9] sm:$0xff]
        %v567 = vpack.i.b16 %v565, %v565
        %v569 = vperm.slane %v567, 0
        %v570 = vpack.i.b16 %v566, %v566
        %v572 = vperm.slane %v570, 0
        %v573 = vunpack.c.l.bf16 %v559
        %v574 = vunpack.c.l.bf16 %v554
        %v575 = vunpack.c.l.bf16 %v569
        %v576 = vunpack.c.l.bf16 %v572
        %v577 = vmul.f32 %v573, %v575
        %v578 = vmul.f32 %v574, %v576
        %v579 = vpack.c.bf16 %v578, %v577
        %580 = vrot.lane.b32.xlu0 %v458, 127
        %v581 = vpop.permute.xlu0 %580
        %582 = vrot.lane.b32.xlu0 %v454, 127
        %v583 = vpop.permute.xlu0 %582
        %vm584 = vcmask 1039360
        %v585 = vsel %vm584, %v581, %v583
        %vm587 = vcmask 1039360
        %v590 = vsel %vm587, %v583, %v581
        %s592 = scalar_lea.vmem %s10, 10
        %v593 = vld [vmem:[%s592] sm:$0x3]
        %595 = vst [vmem:[#allocation1] ss:$9 sm:$0xff] %v593
        %v596 = vld [vmem:[#allocation1] sm:$0xff]
        %v597 = vld [vmem:[#allocation1 + $0x9] sm:$0xff]
        %v598 = vpack.i.b16 %v596, %v596
        %v600 = vperm.slane %v598, 0
        %v601 = vpack.i.b16 %v597, %v597
        %v603 = vperm.slane %v601, 0
        %v604 = vunpack.c.l.bf16 %v585
        %v605 = vunpack.c.l.bf16 %v590
        %v606 = vunpack.c.l.bf16 %v600
        %v607 = vunpack.c.l.bf16 %v603
        %v608 = vmul.f32 %v604, %v606
        %v609 = vmul.f32 %v605, %v607
        %v610 = vpack.c.bf16 %v609, %v608
        %611 = vrot.lane.b32.xlu0 %v458, 113
        %v612 = vpop.permute.xlu0 %611
        %613 = vrot.lane.b32.xlu0 %v454, 113
        %v614 = vpop.permute.xlu0 %613
        %vm615 = vcmask 924672
        %v616 = vsel %vm615, %v612, %v614
        %vm618 = vcmask 924672
        %v621 = vsel %vm618, %v614, %v612
        %s623 = scalar_lea.vmem %s10, 12
        %v624 = vld [vmem:[%s623] sm:$0x3]
        %626 = vst [vmem:[#allocation1] ss:$9 sm:$0xff] %v624
        %v627 = vld [vmem:[#allocation1] sm:$0xff]
        %v628 = vld [vmem:[#allocation1 + $0x9] sm:$0xff]
        %v629 = vpack.i.b16 %v627, %v627
        %v631 = vperm.slane %v629, 0
        %v632 = vpack.i.b16 %v628, %v628
        %v634 = vperm.slane %v632, 0
        %v635 = vunpack.c.l.bf16 %v616
        %v636 = vunpack.c.l.bf16 %v621
        %v637 = vunpack.c.l.bf16 %v631
        %v638 = vunpack.c.l.bf16 %v634
        %v639 = vmul.f32 %v635, %v637
        %v640 = vmul.f32 %v636, %v638
        %v641 = vpack.c.bf16 %v640, %v639
        %642 = vrot.lane.b32.xlu0 %v458, 112
        %v643 = vpop.permute.xlu0 %642
        %644 = vrot.lane.b32.xlu0 %v454, 112
        %v645 = vpop.permute.xlu0 %644
        %vm646 = vcmask 916480
        %v647 = vsel %vm646, %v643, %v645
        %vm649 = vcmask 916480
        %v652 = vsel %vm649, %v645, %v643
        %s654 = scalar_lea.vmem %s10, 14
        %v655 = vld [vmem:[%s654] sm:$0x3]
        %657 = vst [vmem:[#allocation1] ss:$9 sm:$0xff] %v655
        %v658 = vld [vmem:[#allocation1] sm:$0xff]
        %v659 = vld [vmem:[#allocation1 + $0x9] sm:$0xff]
        %v660 = vpack.i.b16 %v658, %v658
        %v662 = vperm.slane %v660, 0
        %v663 = vpack.i.b16 %v659, %v659
        %v665 = vperm.slane %v663, 0
        %v666 = vunpack.c.l.bf16 %v647
        %v667 = vunpack.c.l.bf16 %v652
        %v668 = vunpack.c.l.bf16 %v662
        %v669 = vunpack.c.l.bf16 %v665
        %v670 = vmul.f32 %v666, %v668
        %v671 = vmul.f32 %v667, %v669
        %v672 = vpack.c.bf16 %v671, %v670
        %673 = vrot.lane.b32.xlu0 %v458, 111
        %v674 = vpop.permute.xlu0 %673
        %675 = vrot.lane.b32.xlu0 %v454, 111
        %v676 = vpop.permute.xlu0 %675
        %vm677 = vcmask 908288
        %v678 = vsel %vm677, %v674, %v676
        %vm680 = vcmask 908288
        %v683 = vsel %vm680, %v676, %v674
        %s685 = scalar_lea.vmem %s10, 16
        %v686 = vld [vmem:[%s685] sm:$0x3]
        %688 = vst [vmem:[#allocation1] ss:$9 sm:$0xff] %v686
        %v689 = vld [vmem:[#allocation1] sm:$0xff]
        %v690 = vld [vmem:[#allocation1 + $0x9] sm:$0xff]
        %v691 = vpack.i.b16 %v689, %v689
        %v693 = vperm.slane %v691, 0
        %v694 = vpack.i.b16 %v690, %v690
        %v696 = vperm.slane %v694, 0
        %v697 = vunpack.c.l.bf16 %v678
        %v698 = vunpack.c.l.bf16 %v683
        %v699 = vunpack.c.l.bf16 %v693
        %v700 = vunpack.c.l.bf16 %v696
        %v701 = vmul.f32 %v697, %v699
        %v702 = vmul.f32 %v698, %v700
        %v703 = vpack.c.bf16 %v702, %v701
        %v705 = vunpack.c.l.b16 %v486
        %v706 = vunpack.c.h.b16 %v486
        %v707 = vpack.c.b16 %v705, %v705
        %v708 = vpack.c.b16 %v706, %v706
        %v710 = vunpack.c.l.b16 %v517
        %v711 = vunpack.c.h.b16 %v517
        %v712 = vpack.c.b16 %v710, %v710
        %v713 = vpack.c.b16 %v711, %v711
        %v715 = vunpack.c.l.b16 %v548
        %v716 = vunpack.c.h.b16 %v548
        %v717 = vpack.c.b16 %v715, %v715
        %v718 = vpack.c.b16 %v716, %v716
        %v720 = vunpack.c.l.b16 %v579
        %v721 = vunpack.c.h.b16 %v579
        %v722 = vpack.c.b16 %v720, %v720
        %v723 = vpack.c.b16 %v721, %v721
        %v725 = vunpack.c.l.b16 %v610
        %v726 = vunpack.c.h.b16 %v610
        %v727 = vpack.c.b16 %v725, %v725
        %v728 = vpack.c.b16 %v726, %v726
        %v730 = vunpack.c.l.b16 %v641
        %v731 = vunpack.c.h.b16 %v641
        %v732 = vpack.c.b16 %v730, %v730
        %v733 = vpack.c.b16 %v731, %v731
        %v735 = vunpack.c.l.b16 %v672
        %v736 = vunpack.c.h.b16 %v672
        %v737 = vpack.c.b16 %v735, %v735
        %v738 = vpack.c.b16 %v736, %v736
        %v740 = vunpack.c.l.b16 %v703
        %v741 = vunpack.c.h.b16 %v703
        %v742 = vpack.c.b16 %v740, %v740
        %v743 = vpack.c.b16 %v741, %v741
        %vm744 = vcmask 1043456
        %v747 = vsel %vm744, %v707, %v712
        %v751 = vsel %vm744, %v708, %v713
        %v755 = vsel %vm744, %v717, %v722
        %v759 = vsel %vm744, %v718, %v723
        %v763 = vsel %vm744, %v458, %v727
        %v767 = vsel %vm744, %v454, %v728
        %v771 = vsel %vm744, %v732, %v737
        %v775 = vsel %vm744, %v733, %v738
        %v777 = vld [vmem:[%s4] sm:$0xf]
        %vm778 = vcmask 588800
        %v780 = vsel %vm778, %v777, 0
        %v783 = vsel %vm744, %v742, 0
        %v786 = vsel %vm744, %v743, 0
        %788 = vmatpush.bf16.msra.mxu0 0
        %789 = vmatpush.bf16.msra.mxu0 0
        %790 = vmatpush.bf16.msra.mxu0 0
        %791 = vmatpush.bf16.msra.mxu0 %v783
        %792 = vmatpush.bf16.msra.mxu0 %v771
        %793 = vmatpush.bf16.msra.mxu0 %v763
        %794 = vmatpush.bf16.msra.mxu0 %v755
        %795 = vmatpush.bf16.msra.mxu0 %v747
        %796 = vmatmul.bf16.gmra.mxu0 %v780
        %v797 = vpop.f32.mrf.mxu0
        %v798 = vadd.f32 0.0, %v797
        %v799 = vpop.f32.mrf.mxu0
        %800 = vdwg.mxu0
        %801 = vmatpush.bf16.msra.mxu0 0
        %802 = vmatpush.bf16.msra.mxu0 0
        %803 = vmatpush.bf16.msra.mxu0 0
        %804 = vmatpush.bf16.msra.mxu0 %v786
        %805 = vmatpush.bf16.msra.mxu0 %v775
        %806 = vmatpush.bf16.msra.mxu0 %v767
        %807 = vmatpush.bf16.msra.mxu0 %v759
        %808 = vmatpush.bf16.msra.mxu0 %v751
        %809 = vmatmul.bf16.gmra.mxu0 %v780
        %v810 = vpop.f32.mrf.mxu0
        %v811 = vadd.f32 0.0, %v810
        %v812 = vpop.f32.mrf.mxu0
        %813 = vdwg.mxu0
        %v814 = vld [vmem:[%s5] sm:$0xff]
        %816 = vset.pattern.permute.xlu0 0
        %817 = vperm.xlu0 %816, %v814
        %v818 = vpop.permute.xlu0 %817
        %v820 = vmul.f32 %v798, %v818
        %v821 = vmul.f32 %v811, %v818
        %v822 = vld [vmem:[%s6] sm:$0xff]
        %824 = vset.pattern.permute.xlu0 0
        %825 = vperm.xlu0 %824, %v822
        %v826 = vpop.permute.xlu0 %825
        %v828 = vadd.f32 %v820, %v826
        %v829 = vadd.f32 %v821, %v826
        %v830 = vmax.f32 %v828, 0.0
        %v831 = vmax.f32 %v829, 0.0
        %v832 = vpack.c.bf16 %v830, %v830
        %v833 = vpack.c.bf16 %v831, %v831
        %v834 = vld [vmem:[%s7] sm:$0x3]
        %vm835 = vcmask 64512
        %v837 = vsel %vm835, %v834, 0
        %v840 = vsel %vm744, %v832, 0
        %v843 = vsel %vm744, %v833, 0
        %845 = vmatpush.bf16.msra.mxu0 0
        %846 = vmatpush.bf16.msra.mxu0 0
        %847 = vmatpush.bf16.msra.mxu0 0
        %848 = vmatpush.bf16.msra.mxu0 0
        %849 = vmatpush.bf16.msra.mxu0 0
        %850 = vmatpush.bf16.msra.mxu0 0
        %851 = vmatpush.bf16.msra.mxu0 0
        %852 = vmatpush.bf16.msra.mxu0 %v840
        %853 = vmatmul.bf16.gmra.mxu0 %v837
        %v854 = vpop.f32.mrf.mxu0
        %v855 = vadd.f32 0.0, %v854
        %v856 = vpop.f32.mrf.mxu0
        %857 = vdwg.mxu0
        %858 = vmatpush.bf16.msra.mxu0 0
        %859 = vmatpush.bf16.msra.mxu0 0
        %860 = vmatpush.bf16.msra.mxu0 0
        %861 = vmatpush.bf16.msra.mxu0 0
        %862 = vmatpush.bf16.msra.mxu0 0
        %863 = vmatpush.bf16.msra.mxu0 0
        %864 = vmatpush.bf16.msra.mxu0 0
        %865 = vmatpush.bf16.msra.mxu0 %v843
        %866 = vmatmul.bf16.gmra.mxu0 %v837
        %v867 = vpop.f32.mrf.mxu0
        %v868 = vadd.f32 0.0, %v867
        %v869 = vpop.f32.mrf.mxu0
        %870 = vdwg.mxu0
        %v871 = vld [vmem:[%s8] sm:$0xf]
        %873 = vset.pattern.permute.xlu0 0
        %874 = vperm.xlu0 %873, %v871
        %v875 = vpop.permute.xlu0 %874
        %v877 = vmul.f32 %v855, %v875
        %v878 = vmul.f32 %v868, %v875
        %v879 = vld [vmem:[%s9] sm:$0xf]
        %881 = vset.pattern.permute.xlu0 0
        %882 = vperm.xlu0 %881, %v879
        %v883 = vpop.permute.xlu0 %882
        %v885 = vadd.f32 %v877, %v883
        %v886 = vadd.f32 %v878, %v883
        %887 = vst [vmem:[#allocation1] ss:$2 sm:$0xff] %v386
        %v888 = vld.sshfl [vmem:[#allocation1] sm:$0xff pattern:$0x75316420]
        %v889 = vld.sshfl [vmem:[#allocation1 + $0x8] sm:$0xff pattern:$0x75316420]
        %v892 = vadd.f32 %v885, %v888
        %v893 = vadd.f32 %v886, %v889
        %v894 = vmax.f32 %v892, 0.0
        %v895 = vmax.f32 %v893, 0.0
        %v898 = vrot.slane %v895, 4
        %v899 = vsel %vm744, %v894, %v898
        %901 = vst [vmem:[%s379] sm:$0xff] %v899
        %s902 = sand.u32 %s269, 1
        %s903 = scalar_lea.sflag [#allocation3], %s902
        %s904 = sand.u32 %s269, 1
        %s905 = smul.addr %s904, 8
        %s906 = scalar_lea.vmem [#allocation2], %s905
        // Predicated region
        $region65: #{tpu_custom_call.1} parent=63 // pred_check
          %p907 = pneg %p279
        $region66: #{tpu_custom_call.1} parent=63 // pred_check_branch
          %909 = sbr.rel (%p907) target = $region68
        $region67: #{tpu_custom_call.1} parent=63 // pred_region
          %911 = vsyncadd %s903, 0
          %s912 = smul.addr %s25, 2
          %s913 = smul.addr %s912, 4
          %s914 = scalar_lea.hbm %s11, %s913
          %s916 = sshll.u32 %s906, 4
          %s917 = int_to_ptr.vmem [resolvable:$true] %s916
          %s918 = sshll.u32 %s914, 4
          %s919 = int_to_ptr.hbm [resolvable:$true] %s918
          %921 = dma.vmem_to_hbm [thread:$0]  %s917, 128, %s919, %s903
        $region68: #{tpu_custom_call.1} parent=63 // pred_fallthru
          _
      $region64: #{tpu_custom_call.1} parent=5 // pred_fallthru
        _
      %p922 = scmp.le.s32.totalorder 2, %s20
      // Predicated region
      $region69: #{tpu_custom_call.1} parent=5 // pred_check
        %p923 = pneg %p922
      $region70: #{tpu_custom_call.1} parent=5 // pred_check_branch
        %925 = sbr.rel (%p923) target = $region72
      $region71: #{tpu_custom_call.1} parent=5 // pred_region
        %s926 = ssub.s32 %s20, 2
        // Predicated region
        $region73: #{tpu_custom_call.1} parent=71 // pred_check
          %p927 = pneg %p285
        $region74: #{tpu_custom_call.1} parent=71 // pred_check_branch
          %929 = sbr.rel (%p927) target = $region76
        $region75: #{tpu_custom_call.1} parent=71 // pred_region
          %s930 = sand.u32 %s270, 1
          %s931 = scalar_lea.sflag [#allocation3], %s930
          %s932 = sand.u32 %s270, 1
          %s933 = smul.addr %s932, 8
          %s934 = scalar_lea.vmem [#allocation2], %s933
          %936 = dma.done %s931, 128
        $region76: #{tpu_custom_call.1} parent=71 // pred_fallthru
          _
      $region72: #{tpu_custom_call.1} parent=5 // pred_fallthru
        _
    $region6: #{tpu_custom_call.1} parent=1 // loop_footer
      %s24 = sadd.s32 1, %s20
    $region7: #{tpu_custom_call.1} parent=1 // loop_footer_branch
      %19 = sbr.rel target = $region3
    $region8: #{tpu_custom_call.1} parent=1 // loop_exit
      _
    %937 = vsyncpa [#allocation3], 1
    %s938 = scalar_lea.sflag [#allocation3], 1
    %939 = vsyncpa %s938, 1

</llo_original>
